<compile_context>
chip_gen: v6e
topology: v6e:2x2x1
jax: 0.10.0
libtpu: 0.0.40
codegen_flags: <defaults>
</compile_context>

<pallas_src>
import functools

import jax
import jax.numpy as jnp
from jax.experimental import pallas as pl
from jax.experimental.pallas import tpu as pltpu


# ---------------------------------------------------------------------------
# Generation-aware budgets
# ---------------------------------------------------------------------------
def _tpu_generation_params():
    """Return (x_block_budget_bytes, vmem_limit_bytes, min_grid_steps)."""
    vmem_cap = 64 * 1024 * 1024  # conservative default (v7x per-TC VMEM)
    try:
        vmem_cap = int(pltpu.get_tpu_info().vmem_capacity_bytes)
    except Exception:
        pass
    if vmem_cap >= 96 * 1024 * 1024:
        # v5e / v6e: 128 MiB VMEM, single TensorCore per chip.
        return 16 * 1024 * 1024, 96 * 1024 * 1024, 1
    # v7x-class: 64 MiB VMEM, 2 TensorCores -> keep >= 2 parallel grid steps.
    return 8 * 1024 * 1024, 44 * 1024 * 1024, 2


# ---------------------------------------------------------------------------
# Kernels
# ---------------------------------------------------------------------------
def _se_single_pass_kernel(x_ref, w1_ref, b1_ref, w2_ref, b2_ref, o_ref):
    # x_ref: (Nb, C, HW) native dtype; weights native dtype; biases f32.
    hw = x_ref.shape[-1]
    # squeeze: f32 accumulation, no full-block f32 temp materialized.
    xsum = jnp.sum(x_ref[...], axis=-1, dtype=jnp.float32)             # (Nb, C)
    xm = xsum * (1.0 / hw)
    # excitation: fc1 (1x1 conv) -> relu -> fc2 (1x1 conv) -> sigmoid.
    h = jnp.dot(xm.astype(w1_ref.dtype), w1_ref[...],
                preferred_element_type=jnp.float32) + b1_ref[...]
    h = jnp.maximum(h, 0.0)                                            # (Nb, Cr)
    s = jnp.dot(h.astype(w2_ref.dtype), w2_ref[...],
                preferred_element_type=jnp.float32) + b2_ref[...]
    s = jax.nn.sigmoid(s)                                              # (Nb, C) f32
    # scale: multiply in the input's native dtype (bf16-native VPU on v6e/v7x,
    # avoids a full f32 copy of a multi-MiB block).  Re-read x from the ref.
    s_nat = s.astype(o_ref.dtype)
    o_ref[...] = x_ref[...] * s_nat[:, :, None]


def _se_pool_kernel(x_ref, w1_ref, b1_ref, w2_ref, b2_ref, scale_ref, acc_ref,
                    *, hw_total):
    # Phase 1 of the tiled path. x_ref: (1, C, t_hw); scale_ref: (1, C) f32.
    # x may be zero-padded along HW; the zeros don't change the sum and the
    # mean divides by the TRUE hw_total.
    k = pl.program_id(1)

    @pl.when(k == 0)
    def _():
        acc_ref[...] = jnp.zeros_like(acc_ref)

    acc_ref[...] += jnp.sum(x_ref[...], axis=-1, dtype=jnp.float32)    # (1, C)

    @pl.when(k == pl.num_programs(1) - 1)
    def _():
        xm = acc_ref[...] * (1.0 / hw_total)
        h = jnp.dot(xm.astype(w1_ref.dtype), w1_ref[...],
                    preferred_element_type=jnp.float32) + b1_ref[...]
        h = jnp.maximum(h, 0.0)
        s = jnp.dot(h.astype(w2_ref.dtype), w2_ref[...],
                    preferred_element_type=jnp.float32) + b2_ref[...]
        scale_ref[...] = jax.nn.sigmoid(s)                             # (1, C)


def _se_scale_kernel(x_ref, s_ref, o_ref):
    # Phase 2: x (1, C, t_hw) * scale (1, C) broadcast over the HW tile,
    # multiply done in the input's native dtype.
    s_nat = s_ref[...].astype(o_ref.dtype)
    o_ref[...] = x_ref[...] * s_nat[:, :, None]


# ---------------------------------------------------------------------------
# Wrapper
# ---------------------------------------------------------------------------
def _largest_divisor_leq(n, cap):
    cap = max(1, min(n, cap))
    for d in range(cap, 0, -1):
        if n % d == 0:
            return d
    return 1


def _pick_hw_tile(hw_pad, c, itemsize, budget):
    # hw_pad is a multiple of 128; pick the largest 128-multiple divisor whose
    # (C, t_hw) block fits in `budget` bytes (always at least one candidate).
    cands = [d for d in range(128, hw_pad + 1, 128) if hw_pad % d == 0]
    fitting = [d for d in cands if c * d * itemsize <= budget]
    return max(fitting) if fitting else min(cands)


def se_module(x_nchw, w1, b1, w2, b2, *, max_block_bytes=None):
    """SE forward. x_nchw: (N, C, H, W); w1: (C, Cr); b1: (Cr,); w2: (Cr, C); b2: (C,)."""
    budget, vmem_limit, min_grid_steps = _tpu_generation_params()
    if max_block_bytes is None:
        max_block_bytes = budget

    N, C, H, W = x_nchw.shape
    Cr = w1.shape[1]
    HW = H * W
    x = x_nchw.reshape(N, C, HW)                 # native dtype, no forced upcast
    itemsize = x.dtype.itemsize

    # Weights stay in their native dtype (bf16 weights hit the MXU directly with
    # an f32 accumulator); biases kept f32 for the accumulation epilogue.
    b1f = b1.reshape(1, Cr).astype(jnp.float32)
    b2f = b2.reshape(1, C).astype(jnp.float32)

    per_image_bytes = C * HW * itemsize

    if per_image_bytes <= max_block_bytes:
        # ---- Single-pass path: one or more whole images per grid step. ----
        imgs_cap = max(1, max_block_bytes // per_image_bytes)
        if min_grid_steps > 1:
            # v7x: keep >= min_grid_steps "parallel" steps so both TCs work.
            imgs_cap = min(imgs_cap, max(1, N // min_grid_steps))
        nb = _largest_divisor_leq(N, imgs_cap)
        out = pl.pallas_call(
            _se_single_pass_kernel,
            out_shape=jax.ShapeDtypeStruct((N, C, HW), x.dtype),
            grid=(N // nb,),
            in_specs=[
                pl.BlockSpec((nb, C, HW), lambda n: (n, 0, 0)),
                pl.BlockSpec((C, Cr), lambda n: (0, 0)),
                pl.BlockSpec((1, Cr), lambda n: (0, 0)),
                pl.BlockSpec((Cr, C), lambda n: (0, 0)),
                pl.BlockSpec((1, C), lambda n: (0, 0)),
            ],
            out_specs=pl.BlockSpec((nb, C, HW), lambda n: (n, 0, 0)),
            compiler_params=pltpu.CompilerParams(
                dimension_semantics=("parallel",),
                vmem_limit_bytes=vmem_limit),
        )(x, w1, b1f, w2, b2f)
        return out.reshape(N, C, H, W)

    # ---- Two-phase tiled path: feature map too large for one VMEM block. ----
    # Keep HW lane-aligned: zero-pad to a multiple of 128 (zeros don't affect
    # the pooled sum; the mean divides by the true HW; padding is sliced off).
    HW_pad = ((HW + 127) // 128) * 128
    x_pad = x if HW_pad == HW else jnp.pad(x, ((0, 0), (0, 0), (0, HW_pad - HW)))

    # Phase 1 has no large output (only the x tile is double-buffered), so it
    # can stream ~2x bigger tiles than phase 2 (which double-buffers in + out).
    t_hw1 = _pick_hw_tile(HW_pad, C, itemsize, 2 * max_block_bytes)
    t_hw2 = _pick_hw_tile(HW_pad, C, itemsize, max_block_bytes)
    kt1 = HW_pad // t_hw1
    kt2 = HW_pad // t_hw2

    scale = pl.pallas_call(
        functools.partial(_se_pool_kernel, hw_total=HW),
        out_shape=jax.ShapeDtypeStruct((N, C), jnp.float32),   # lane-dense scale
        grid=(N, kt1),
        in_specs=[
            pl.BlockSpec((1, C, t_hw1), lambda n, k: (n, 0, k)),
            pl.BlockSpec((C, Cr), lambda n, k: (0, 0)),
            pl.BlockSpec((1, Cr), lambda n, k: (0, 0)),
            pl.BlockSpec((Cr, C), lambda n, k: (0, 0)),
            pl.BlockSpec((1, C), lambda n, k: (0, 0)),
        ],
        out_specs=pl.BlockSpec((1, C), lambda n, k: (n, 0)),
        scratch_shapes=[pltpu.VMEM((1, C), jnp.float32)],
        compiler_params=pltpu.CompilerParams(
            dimension_semantics=("parallel", "arbitrary"),
            vmem_limit_bytes=vmem_limit),
    )(x_pad, w1, b1f, w2, b2f)

    out = pl.pallas_call(
        _se_scale_kernel,
        out_shape=jax.ShapeDtypeStruct((N, C, HW_pad), x.dtype),
        grid=(N, kt2),
        in_specs=[
            pl.BlockSpec((1, C, t_hw2), lambda n, k: (n, 0, k)),
            pl.BlockSpec((1, C), lambda n, k: (n, 0)),
        ],
        out_specs=pl.BlockSpec((1, C, t_hw2), lambda n, k: (n, 0, k)),
        compiler_params=pltpu.CompilerParams(
            dimension_semantics=("parallel", "parallel"),
            vmem_limit_bytes=vmem_limit),
    )(x_pad, scale)
    if HW_pad != HW:
        out = out[:, :, :HW]
    return out.reshape(N, C, H, W)


def se_reference(x_nchw, w1, b1, w2, b2):
    # Pure-JAX reference mirroring the PyTorch forward.
    xm = jnp.mean(x_nchw.astype(jnp.float32), axis=(2, 3))            # (N, C)
    h = jnp.maximum(xm @ w1.astype(jnp.float32) + b1, 0.0)            # (N, Cr)
    s = jax.nn.sigmoid(h @ w2.astype(jnp.float32) + b2)               # (N, C)
    return (x_nchw.astype(jnp.float32) * s[:, :, None, None]).astype(x_nchw.dtype)


if __name__ == "__main__":
    # SEModule(channels=4, reduction=2) on input (2, 4, 16, 16)
    N, C, H, W = 2, 4, 16, 16
    reduction = 2
    Cr = C // reduction

    key = jax.random.PRNGKey(0)
    kx, kw1, kb1, kw2, kb2 = jax.random.split(key, 5)
    x = jax.random.normal(kx, (N, C, H, W), dtype=jnp.float32)

    # PyTorch fc1 weight has shape (Cr, C, 1, 1); we store its transpose (C, Cr)
    # so the kernel computes pooled @ w1. Same convention for fc2.
    w1 = 0.1 * jax.random.normal(kw1, (C, Cr), dtype=jnp.float32)
    b1 = 0.1 * jax.random.normal(kb1, (Cr,), dtype=jnp.float32)
    w2 = 0.1 * jax.random.normal(kw2, (Cr, C), dtype=jnp.float32)
    b2 = 0.1 * jax.random.normal(kb2, (C,), dtype=jnp.float32)

    ref = se_reference(x, w1, b1, w2, b2)

    # 1) Single-pass path (default generation-aware budget).
    out_single = jax.block_until_ready(se_module(x, w1, b1, w2, b2))
    assert out_single.shape == (N, C, H, W)
    assert out_single.dtype == x.dtype
    assert jnp.allclose(out_single, ref, atol=1e-5, rtol=1e-5), \
        "single-pass mismatch vs reference"

    # 2) Two-phase tiled path (force it by shrinking the block budget so the
    #    HW axis is split: phase-1 tile 256, phase-2 tiles of 128).
    out_tiled = jax.block_until_ready(
        se_module(x, w1, b1, w2, b2, max_block_bytes=C * 128 * 4))
    assert jnp.allclose(out_tiled, ref, atol=1e-5, rtol=1e-5), \
        "two-phase mismatch vs reference"

    # 3) Two-phase tiled path with HW not a multiple of 128 (exercises the
    #    zero-pad + slice-back handling).
    x3 = jax.random.normal(kx, (N, C, 10, 10), dtype=jnp.float32)
    ref3 = se_reference(x3, w1, b1, w2, b2)
    out3 = jax.block_until_ready(
        se_module(x3, w1, b1, w2, b2, max_block_bytes=1024))
    assert out3.shape == (N, C, 10, 10)
    assert jnp.allclose(out3, ref3, atol=1e-5, rtol=1e-5), \
        "unaligned-HW tiled mismatch vs reference"

    print("KERNEL_OK")
</pallas_src>

<mosaic_0001>
module attributes {stable_mosaic.version = 11 : i64} {
  func.func @_se_single_pass_kernel(%arg0: i32, %arg1: memref<1x4x256xf32, #tpu.memory_space<vmem>>, %arg2: memref<4x2xf32, #tpu.memory_space<vmem>>, %arg3: memref<1x2xf32, #tpu.memory_space<vmem>>, %arg4: memref<2x4xf32, #tpu.memory_space<vmem>>, %arg5: memref<1x4xf32, #tpu.memory_space<vmem>>, %arg6: memref<1x4x256xf32, #tpu.memory_space<vmem>>) attributes {dimension_semantics = [#tpu.dimension_semantics<parallel>], iteration_bounds = array<i64: 2>, scalar_prefetch = 0 : i64, scratch_operands = 0 : i64, tpu.core_type = #tpu.core_type<tc>, window_params = [{transform_indices = @transform_0, window_bounds = array<i64: 1, 4, 256>}, {pipeline_mode = #tpu.pipeline_mode<synchronous>, transform_indices = @transform_1, window_bounds = array<i64: 4, 2>}, {pipeline_mode = #tpu.pipeline_mode<synchronous>, transform_indices = @transform_2, window_bounds = array<i64: 1, 2>}, {pipeline_mode = #tpu.pipeline_mode<synchronous>, transform_indices = @transform_3, window_bounds = array<i64: 2, 4>}, {pipeline_mode = #tpu.pipeline_mode<synchronous>, transform_indices = @transform_4, window_bounds = array<i64: 1, 4>}, {transform_indices = @transform_5, window_bounds = array<i64: 1, 4, 256>}]} {
    %c0 = arith.constant 0 : index
    %c0_0 = arith.constant 0 : index
    %c0_1 = arith.constant 0 : index
    %0 = vector.load %arg1[%c0, %c0_0, %c0_1] : memref<1x4x256xf32, #tpu.memory_space<vmem>>, vector<1x4x256xf32>
    %cst = arith.constant dense<0.000000e+00> : vector<1x4xf32>
    %1 = vector.multi_reduction <add>, %0, %cst [2] : vector<1x4x256xf32> to vector<1x4xf32>
    %cst_2 = arith.constant 3.906250e-03 : f32
    %2 = vector.broadcast %cst_2 : f32 to vector<1x4xf32>
    %3 = arith.mulf %1, %2 : vector<1x4xf32>
    %c0_3 = arith.constant 0 : index
    %c0_4 = arith.constant 0 : index
    %4 = vector.load %arg2[%c0_3, %c0_4] : memref<4x2xf32, #tpu.memory_space<vmem>>, vector<4x2xf32>
    %cst_5 = arith.constant dense<0.000000e+00> : vector<1x2xf32>
    %5 = tpu.matmul %3, %4, %cst_5 {dimension_numbers = #tpu.dot_dimension_numbers<[1], [0], [0], [1], [0, 0, 1, 1], [], []>} : vector<1x4xf32>, vector<4x2xf32>, vector<1x2xf32> -> vector<1x2xf32>
    %c0_6 = arith.constant 0 : index
    %c0_7 = arith.constant 0 : index
    %6 = vector.load %arg3[%c0_6, %c0_7] : memref<1x2xf32, #tpu.memory_space<vmem>>, vector<1x2xf32>
    %7 = arith.addf %5, %6 : vector<1x2xf32>
    %cst_8 = arith.constant 0.000000e+00 : f32
    %8 = vector.broadcast %cst_8 : f32 to vector<1x2xf32>
    %9 = arith.maximumf %7, %8 : vector<1x2xf32>
    %c0_9 = arith.constant 0 : index
    %c0_10 = arith.constant 0 : index
    %10 = vector.load %arg4[%c0_9, %c0_10] : memref<2x4xf32, #tpu.memory_space<vmem>>, vector<2x4xf32>
    %cst_11 = arith.constant dense<0.000000e+00> : vector<1x4xf32>
    %11 = tpu.matmul %9, %10, %cst_11 {dimension_numbers = #tpu.dot_dimension_numbers<[1], [0], [0], [1], [0, 0, 1, 1], [], []>} : vector<1x2xf32>, vector<2x4xf32>, vector<1x4xf32> -> vector<1x4xf32>
    %c0_12 = arith.constant 0 : index
    %c0_13 = arith.constant 0 : index
    %12 = vector.load %arg5[%c0_12, %c0_13] : memref<1x4xf32, #tpu.memory_space<vmem>>, vector<1x4xf32>
    %13 = arith.addf %11, %12 : vector<1x4xf32>
    %14 = arith.negf %13 : vector<1x4xf32>
    %15 = math.exp %14 : vector<1x4xf32>
    %cst_14 = arith.constant 1.000000e+00 : f32
    %16 = vector.broadcast %cst_14 : f32 to vector<1x4xf32>
    %17 = arith.addf %16, %15 : vector<1x4xf32>
    %18 = arith.divf %16, %17 : vector<1x4xf32>
    %c0_15 = arith.constant 0 : index
    %c0_16 = arith.constant 0 : index
    %c0_17 = arith.constant 0 : index
    %19 = vector.load %arg1[%c0_15, %c0_16, %c0_17] : memref<1x4x256xf32, #tpu.memory_space<vmem>>, vector<1x4x256xf32>
    %20 = vector.shape_cast %18 : vector<1x4xf32> to vector<1x4x1xf32>
    %21 = vector.broadcast %20 : vector<1x4x1xf32> to vector<1x4x256xf32>
    %22 = arith.mulf %19, %21 : vector<1x4x256xf32>
    %c0_18 = arith.constant 0 : index
    %c0_19 = arith.constant 0 : index
    %c0_20 = arith.constant 0 : index
    %23 = vector.load %arg6[%c0_18, %c0_19, %c0_20] : memref<1x4x256xf32, #tpu.memory_space<vmem>>, vector<1x4x256xf32>
    tpu.vector_store %arg6[%c0_18, %c0_19, %c0_20], %22 {strides = array<i32>} : memref<1x4x256xf32, #tpu.memory_space<vmem>>, vector<1x4x256xf32>,
    return
  }
  func.func @transform_0(%arg0: i32) -> (i32, i32, i32) {
    %c0_i32 = arith.constant 0 : i32
    %c0_i32_0 = arith.constant 0 : i32
    %c0_i32_1 = arith.constant 0 : i32
    return %arg0, %c0_i32, %c0_i32_0 : i32, i32, i32
  }
  func.func @transform_1(%arg0: i32) -> (i32, i32) {
    %c0_i32 = arith.constant 0 : i32
    %c0_i32_0 = arith.constant 0 : i32
    %c0_i32_1 = arith.constant 0 : i32
    return %c0_i32, %c0_i32_0 : i32, i32
  }
  func.func @transform_2(%arg0: i32) -> (i32, i32) {
    %c0_i32 = arith.constant 0 : i32
    %c0_i32_0 = arith.constant 0 : i32
    %c0_i32_1 = arith.constant 0 : i32
    return %c0_i32, %c0_i32_0 : i32, i32
  }
  func.func @transform_3(%arg0: i32) -> (i32, i32) {
    %c0_i32 = arith.constant 0 : i32
    %c0_i32_0 = arith.constant 0 : i32
    %c0_i32_1 = arith.constant 0 : i32
    return %c0_i32, %c0_i32_0 : i32, i32
  }
  func.func @transform_4(%arg0: i32) -> (i32, i32) {
    %c0_i32 = arith.constant 0 : i32
    %c0_i32_0 = arith.constant 0 : i32
    %c0_i32_1 = arith.constant 0 : i32
    return %c0_i32, %c0_i32_0 : i32, i32
  }
  func.func @transform_5(%arg0: i32) -> (i32, i32, i32) {
    %c0_i32 = arith.constant 0 : i32
    %c0_i32_0 = arith.constant 0 : i32
    %c0_i32_1 = arith.constant 0 : i32
    return %arg0, %c0_i32, %c0_i32_0 : i32, i32, i32
  }
}

</mosaic_0001>

<llo_original>
// kernel: tpu_custom_call.1
$region0: #{tpu_custom_call.1}
  #allocation0 [shape = 'u32[]', space=smem, size = 0x4, offset = 0x4, fixed_abs, tag = 'smem constant byte address 0x4 - core index']
  #allocation1 [shape = 'u32[144,128]{1,0:T(1,128)}', space=vmem, size = 0x12000, scoped, tag = 'internal scratch']
  %s0 = inlined_call_operand.hbm [shape: f32[2,4,256], index: 0, kind: input, shape index: {}]
  %s1 = inlined_call_operand.vmem [shape: f32[4,2], index: 1, kind: input, shape index: {}]
  %s2 = inlined_call_operand.vmem [shape: f32[1,2], index: 2, kind: input, shape index: {}]
  %s3 = inlined_call_operand.vmem [shape: f32[2,4], index: 3, kind: input, shape index: {}]
  %s4 = inlined_call_operand.vmem [shape: f32[1,4], index: 4, kind: input, shape index: {}]
  %s5 = inlined_call_operand.hbm [shape: f32[2,4,256], index: 5, kind: output, shape index: {}]
  %s6 = sld [smem:[#allocation0]]
  $region57: #{tpu_custom_call.1} parent=0
    _
  %s8 = ssub.s32 1, %s6
  %s9 = scalar_select 0, %s8, %s6
  $region1: #{tpu_custom_call.1} parent=0
    #allocation2 [shape = 'u8[8192]{0}', space=vmem, size = 0x2000, scoped, tag = 'input window, operand 0']
    #allocation3 [shape = 's32[2]{0}', space=sflag, size = 0x8, scoped, tag = 'scoped memory for tpu_custom_call.1']
    #allocation4 [shape = 's32[2]{0}', space=sflag, size = 0x8, scoped, tag = 'scoped memory for tpu_custom_call.1']
    #allocation5 [shape = 'u8[8192]{0}', space=vmem, size = 0x2000, scoped, tag = 'output window, operand 0']
    %10 = vsyncpa [#allocation3], 0
    %s11 = scalar_lea.sflag [#allocation3], 1
    %12 = vsyncpa %s11, 0
    %13 = vsyncpa [#allocation4], 0
    %s14 = scalar_lea.sflag [#allocation4], 1
    %15 = vsyncpa %s14, 0
    loop: start=0, step=1, limit=4
    $region2: #{tpu_custom_call.1} parent=1 // loop_pre_header
      _
    $region3: #{tpu_custom_call.1} parent=1 // loop_header
      %s17 = sphi 0, %s21
      %p18 = scmp.ge.s32.totalorder %s17, 4
      %s27 = sphi 0, %s29
      %s30 = sphi 0, %s27
      %s31 = sphi 0, %s30
      %s47 = sphi 0, %s31
      %s51 = sphi 0, %s51
      %s53 = sphi 0, %s51
      %s54 = sphi 0, %s53
      %s68 = sphi 0, %s54
      %s72 = sphi 0, %s72
      %s74 = sphi 0, %s72
      %s75 = sphi 0, %s74
      %s89 = sphi 0, %s75
      %s93 = sphi 0, %s93
      %s95 = sphi 0, %s93
      %s96 = sphi 0, %s95
      %s110 = sphi 0, %s96
      %s114 = sphi 0, %s114
      %s116 = sphi 0, %s114
      %s117 = sphi 0, %s116
      %s131 = sphi 0, %s117
      %s137 = sphi 0, %s139
      %s140 = sphi 0, %s137
      %s141 = sphi 0, %s140
      %s157 = sphi 0, %s141
    $region4: #{tpu_custom_call.1} parent=1 // loop_header_branch
      %20 = sbr.rel (%p18) target = $region8
    $region5: #{tpu_custom_call.1} parent=1 // loop_body
      %s22 = ssub.s32 %s17, 1
      %s23 = ssub.s32 %s17, 2
      %s24 = sadd.s32 %s17, 1
      %s25 = ssub.s32 %s17, %s24
      %p26 = scmp.eq.s32.totalorder %s25, 0
      %s28 = sadd.s32 %s27, 1
      %s29 = scalar_select %p26, %s27, %s28
      %p32 = pneg %p26
      %p33 = scmp.eq.s32.totalorder %s17, 1
      %p34 = por %p32, %p33
      %p35 = scmp.ne.s32.totalorder %s27, %s30
      %p36 = scmp.eq.s32.totalorder %s17, 0
      %p37 = por %p35, %p36
      %p38 = scmp.ne.s32.totalorder %s27, %s30
      %p39 = scmp.eq.s32.totalorder %s22, 1
      %p40 = por %p38, %p39
      %p41 = scmp.ne.s32.totalorder %s30, %s31
      %p42 = scmp.eq.s32.totalorder %s22, 0
      %p43 = por %p41, %p42
      %p44 = scmp.ne.s32.totalorder %s30, %s31
      %p45 = scmp.eq.s32.totalorder %s23, 1
      %p46 = por %p44, %p45
      %p48 = scmp.ne.s32.totalorder %s31, %s47
      %p49 = scmp.eq.s32.totalorder %s23, 0
      %p50 = por %p48, %p49
      %s52 = sadd.s32 %s51, 1
      %p55 = scmp.eq.s32.totalorder %s17, 1
      %p56 = scmp.ne.s32.totalorder %s51, %s53
      %p57 = scmp.eq.s32.totalorder %s17, 0
      %p58 = por %p56, %p57
      %p59 = scmp.ne.s32.totalorder %s51, %s53
      %p60 = scmp.eq.s32.totalorder %s22, 1
      %p61 = por %p59, %p60
      %p62 = scmp.ne.s32.totalorder %s53, %s54
      %p63 = scmp.eq.s32.totalorder %s22, 0
      %p64 = por %p62, %p63
      %p65 = scmp.ne.s32.totalorder %s53, %s54
      %p66 = scmp.eq.s32.totalorder %s23, 1
      %p67 = por %p65, %p66
      %p69 = scmp.ne.s32.totalorder %s54, %s68
      %p70 = scmp.eq.s32.totalorder %s23, 0
      %p71 = por %p69, %p70
      %s73 = sadd.s32 %s72, 1
      %p76 = scmp.eq.s32.totalorder %s17, 1
      %p77 = scmp.ne.s32.totalorder %s72, %s74
      %p78 = scmp.eq.s32.totalorder %s17, 0
      %p79 = por %p77, %p78
      %p80 = scmp.ne.s32.totalorder %s72, %s74
      %p81 = scmp.eq.s32.totalorder %s22, 1
      %p82 = por %p80, %p81
      %p83 = scmp.ne.s32.totalorder %s74, %s75
      %p84 = scmp.eq.s32.totalorder %s22, 0
      %p85 = por %p83, %p84
      %p86 = scmp.ne.s32.totalorder %s74, %s75
      %p87 = scmp.eq.s32.totalorder %s23, 1
      %p88 = por %p86, %p87
      %p90 = scmp.ne.s32.totalorder %s75, %s89
      %p91 = scmp.eq.s32.totalorder %s23, 0
      %p92 = por %p90, %p91
      %s94 = sadd.s32 %s93, 1
      %p97 = scmp.eq.s32.totalorder %s17, 1
      %p98 = scmp.ne.s32.totalorder %s93, %s95
      %p99 = scmp.eq.s32.totalorder %s17, 0
      %p100 = por %p98, %p99
      %p101 = scmp.ne.s32.totalorder %s93, %s95
      %p102 = scmp.eq.s32.totalorder %s22, 1
      %p103 = por %p101, %p102
      %p104 = scmp.ne.s32.totalorder %s95, %s96
      %p105 = scmp.eq.s32.totalorder %s22, 0
      %p106 = por %p104, %p105
      %p107 = scmp.ne.s32.totalorder %s95, %s96
      %p108 = scmp.eq.s32.totalorder %s23, 1
      %p109 = por %p107, %p108
      %p111 = scmp.ne.s32.totalorder %s96, %s110
      %p112 = scmp.eq.s32.totalorder %s23, 0
      %p113 = por %p111, %p112
      %s115 = sadd.s32 %s114, 1
      %p118 = scmp.eq.s32.totalorder %s17, 1
      %p119 = scmp.ne.s32.totalorder %s114, %s116
      %p120 = scmp.eq.s32.totalorder %s17, 0
      %p121 = por %p119, %p120
      %p122 = scmp.ne.s32.totalorder %s114, %s116
      %p123 = scmp.eq.s32.totalorder %s22, 1
      %p124 = por %p122, %p123
      %p125 = scmp.ne.s32.totalorder %s116, %s117
      %p126 = scmp.eq.s32.totalorder %s22, 0
      %p127 = por %p125, %p126
      %p128 = scmp.ne.s32.totalorder %s116, %s117
      %p129 = scmp.eq.s32.totalorder %s23, 1
      %p130 = por %p128, %p129
      %p132 = scmp.ne.s32.totalorder %s117, %s131
      %p133 = scmp.eq.s32.totalorder %s23, 0
      %p134 = por %p132, %p133
      %s135 = ssub.s32 %s17, %s24
      %p136 = scmp.eq.s32.totalorder %s135, 0
      %s138 = sadd.s32 %s137, 1
      %s139 = scalar_select %p136, %s137, %s138
      %p142 = pneg %p136
      %p143 = scmp.eq.s32.totalorder %s17, 1
      %p144 = por %p142, %p143
      %p145 = scmp.ne.s32.totalorder %s137, %s140
      %p146 = scmp.eq.s32.totalorder %s17, 0
      %p147 = por %p145, %p146
      %p148 = scmp.ne.s32.totalorder %s137, %s140
      %p149 = scmp.eq.s32.totalorder %s22, 1
      %p150 = por %p148, %p149
      %p151 = scmp.ne.s32.totalorder %s140, %s141
      %p152 = scmp.eq.s32.totalorder %s22, 0
      %p153 = por %p151, %p152
      %p154 = scmp.ne.s32.totalorder %s140, %s141
      %p155 = scmp.eq.s32.totalorder %s23, 1
      %p156 = por %p154, %p155
      %p158 = scmp.ne.s32.totalorder %s141, %s157
      %p159 = scmp.eq.s32.totalorder %s23, 0
      %p160 = por %p158, %p159
      %p161 = scmp.le.s32.totalorder 1, %s17
      %p162 = scmp.lt.s32.totalorder %s17, 3
      %p163 = pnand %p161, %p162
      %p164 = pneg %p163
      // Predicated region
      $region9: #{tpu_custom_call.1} parent=5 // pred_check
        _
      $region10: #{tpu_custom_call.1} parent=5 // pred_check_branch
        %166 = sbr.rel (%p163) target = $region12
      $region11: #{tpu_custom_call.1} parent=5 // pred_region
        %s167 = ssub.s32 %s17, 1
        // Predicated region
        $region13: #{tpu_custom_call.1} parent=11 // pred_check
          %p168 = pneg %p64
        $region14: #{tpu_custom_call.1} parent=11 // pred_check_branch
          %170 = sbr.rel (%p168) target = $region16
        $region15: #{tpu_custom_call.1} parent=11 // pred_region
          _
        $region16: #{tpu_custom_call.1} parent=11 // pred_fallthru
          _
        // Predicated region
        $region17: #{tpu_custom_call.1} parent=11 // pred_check
          %p171 = pneg %p85
        $region18: #{tpu_custom_call.1} parent=11 // pred_check_branch
          %173 = sbr.rel (%p171) target = $region20
        $region19: #{tpu_custom_call.1} parent=11 // pred_region
          _
        $region20: #{tpu_custom_call.1} parent=11 // pred_fallthru
          _
        // Predicated region
        $region21: #{tpu_custom_call.1} parent=11 // pred_check
          %p174 = pneg %p106
        $region22: #{tpu_custom_call.1} parent=11 // pred_check_branch
          %176 = sbr.rel (%p174) target = $region24
        $region23: #{tpu_custom_call.1} parent=11 // pred_region
          _
        $region24: #{tpu_custom_call.1} parent=11 // pred_fallthru
          _
        // Predicated region
        $region25: #{tpu_custom_call.1} parent=11 // pred_check
          %p177 = pneg %p127
        $region26: #{tpu_custom_call.1} parent=11 // pred_check_branch
          %179 = sbr.rel (%p177) target = $region28
        $region27: #{tpu_custom_call.1} parent=11 // pred_region
          _
        $region28: #{tpu_custom_call.1} parent=11 // pred_fallthru
          _
      $region12: #{tpu_custom_call.1} parent=5 // pred_fallthru
        _
      %p180 = scmp.lt.s32.totalorder %s17, 2
      // Predicated region
      $region29: #{tpu_custom_call.1} parent=5 // pred_check
        %p181 = pneg %p180
      $region30: #{tpu_custom_call.1} parent=5 // pred_check_branch
        %183 = sbr.rel (%p181) target = $region32
      $region31: #{tpu_custom_call.1} parent=5 // pred_region
        // Predicated region
        $region33: #{tpu_custom_call.1} parent=31 // pred_check
          %p184 = pneg %p37
        $region34: #{tpu_custom_call.1} parent=31 // pred_check_branch
          %186 = sbr.rel (%p184) target = $region36
        $region35: #{tpu_custom_call.1} parent=31 // pred_region
          %s187 = sand.u32 %s27, 1
          %s188 = scalar_lea.sflag [#allocation3], %s187
          %s189 = sand.u32 %s27, 1
          %s190 = smul.addr %s189, 8
          %s191 = scalar_lea.vmem [#allocation2], %s190
          %s193 = ssub.s32 128, 128
          %194 = vsyncadd %s188, %s193
          %s195 = smul.addr %s17, 2
          %s196 = smul.addr %s195, 64
          %s197 = scalar_lea.hbm %s0, %s196
          %s199 = sshll.u32 %s191, 4
          %s200 = int_to_ptr.vmem [resolvable:$true] %s199
          %202 = dma.hbm_to_vmem [thread:$0]  %s197, 128, %s200, %s188
        $region36: #{tpu_custom_call.1} parent=31 // pred_fallthru
          _
      $region32: #{tpu_custom_call.1} parent=5 // pred_fallthru
        _
      %p203 = scmp.le.s32.totalorder 1, %s17
      %p204 = scmp.lt.s32.totalorder %s17, 3
      %p205 = pnand %p203, %p204
      %p206 = pneg %p205
      // Predicated region
      $region37: #{tpu_custom_call.1} parent=5 // pred_check
        _
      $region38: #{tpu_custom_call.1} parent=5 // pred_check_branch
        %208 = sbr.rel (%p205) target = $region40
      $region39: #{tpu_custom_call.1} parent=5 // pred_region
        %s209 = ssub.s32 %s17, 1
        %s210 = sand.u32 %s30, 1
        %s211 = scalar_lea.sflag [#allocation3], %s210
        %s212 = sand.u32 %s30, 1
        %s213 = smul.addr %s212, 8
        %s214 = scalar_lea.vmem [#allocation2], %s213
        // Predicated region
        $region41: #{tpu_custom_call.1} parent=39 // pred_check
          %p215 = pneg %p43
        $region42: #{tpu_custom_call.1} parent=39 // pred_check_branch
          %217 = sbr.rel (%p215) target = $region44
        $region43: #{tpu_custom_call.1} parent=39 // pred_region
          %218 = dma.done %s211, 128
        $region44: #{tpu_custom_call.1} parent=39 // pred_fallthru
          _
        %s219 = sand.u32 %s30, 1
        %s220 = scalar_lea.sflag [#allocation3], %s219
        %s221 = sand.u32 %s30, 1
        %s222 = smul.addr %s221, 8
        %s223 = scalar_lea.vmem [#allocation2], %s222
        %p224 = pneg %p43
        %p225 = pneg %p40
        %p226 = pneg %p64
        %p227 = pneg %p61
        %p228 = pneg %p85
        %p229 = pneg %p82
        %p230 = pneg %p106
        %p231 = pneg %p103
        %p232 = pneg %p127
        %p233 = pneg %p124
        %p234 = pneg %p153
        %p235 = pneg %p150
        %s236 = sand.u32 %s140, 1
        %s237 = scalar_lea.sflag [#allocation4], %s236
        %s238 = sand.u32 %s140, 1
        %s239 = smul.addr %s238, 8
        %s240 = scalar_lea.vmem [#allocation5], %s239
        %v241 = vld [vmem:[%s214] sm:$0xff]
        %v243 = vcombine.high %v241, %v241
        %vm245 = vcmask 1043456
        %v246 = vsel %vm245, %v241, 0.0
        %v247 = vsel %vm245, %v243, 0.0
        %v248 = vadd.f32 %v246, %v247
        %249 = vadd.xlane.f32.xlu0 %v248
        %v250 = vpop.xlane.xlu0 %249
        %v251 = vmul.f32 %v250, 0.00390625
        %v252 = vld [vmem:[%s1] sm:$0xf]
        %v253 = vld [vmem:[%s2] sm:$0x1]
        %v255 = vlaneseq
        %v256 = vand.u32 %v255, 127
        %v257 = vlaneseq
        %v258 = vshrl.u32 %v257, 7
        %v259 = vsub.s32 %v256, %v258
        %v260 = vrot.slane %v251, %v259
        %vm261 = vcmask 31744
        %v262 = vsel %vm261, %v260, 0
        %v265 = vsel %vm245, %v252, 0
        %267 = vmatprep.subr.mxu0 0.0
        %268 = vmatpush1.msra.mxu0 0.0
        %269 = vmatprep.subr.mxu0 0.0
        %270 = vmatpush1.msra.mxu0 0.0
        %271 = vmatprep.subr.mxu0 0.0
        %272 = vmatpush1.msra.mxu0 0.0
        %273 = vmatprep.subr.mxu0 0.0
        %274 = vmatpush1.msra.mxu0 0.0
        %275 = vmatprep.subr.mxu0 0.0
        %276 = vmatpush1.msra.mxu0 0.0
        %277 = vmatprep.subr.mxu0 0.0
        %278 = vmatpush1.msra.mxu0 0.0
        %279 = vmatprep.subr.mxu0 0.0
        %280 = vmatpush1.msra.mxu0 0.0
        %281 = vmatprep.subr.mxu0 0.0
        %282 = vmatpush1.msra.mxu0 0.0
        %283 = vmatprep.subr.mxu0 0.0
        %284 = vmatpush1.msra.mxu0 0.0
        %285 = vmatprep.subr.mxu0 0.0
        %286 = vmatpush1.msra.mxu0 0.0
        %287 = vmatprep.subr.mxu0 0.0
        %288 = vmatpush1.msra.mxu0 0.0
        %289 = vmatprep.subr.mxu0 0.0
        %290 = vmatpush1.msra.mxu0 0.0
        %291 = vmatprep.subr.mxu0 0.0
        %292 = vmatpush1.msra.mxu0 0.0
        %293 = vmatprep.subr.mxu0 0.0
        %294 = vmatpush1.msra.mxu0 0.0
        %295 = vmatprep.subr.mxu0 0.0
        %296 = vmatpush1.msra.mxu0 0.0
        %297 = vmatprep.subr.mxu0 0.0
        %298 = vmatpush1.msra.mxu0 %v265
        %299 = vmatprep.subr.mxu0 0.0
        %300 = vmatpush2.msra.mxu0 0.0
        %301 = vmatprep.subr.mxu0 0.0
        %302 = vmatpush2.msra.mxu0 0.0
        %303 = vmatprep.subr.mxu0 0.0
        %304 = vmatpush2.msra.mxu0 0.0
        %305 = vmatprep.subr.mxu0 0.0
        %306 = vmatpush2.msra.mxu0 0.0
        %307 = vmatprep.subr.mxu0 0.0
        %308 = vmatpush2.msra.mxu0 0.0
        %309 = vmatprep.subr.mxu0 0.0
        %310 = vmatpush2.msra.mxu0 0.0
        %311 = vmatprep.subr.mxu0 0.0
        %312 = vmatpush2.msra.mxu0 0.0
        %313 = vmatprep.subr.mxu0 0.0
        %314 = vmatpush2.msra.mxu0 0.0
        %315 = vmatprep.subr.mxu0 0.0
        %316 = vmatpush2.msra.mxu0 0.0
        %317 = vmatprep.subr.mxu0 0.0
        %318 = vmatpush2.msra.mxu0 0.0
        %319 = vmatprep.subr.mxu0 0.0
        %320 = vmatpush2.msra.mxu0 0.0
        %321 = vmatprep.subr.mxu0 0.0
        %322 = vmatpush2.msra.mxu0 0.0
        %323 = vmatprep.subr.mxu0 0.0
        %324 = vmatpush2.msra.mxu0 0.0
        %325 = vmatprep.subr.mxu0 0.0
        %326 = vmatpush2.msra.mxu0 0.0
        %327 = vmatprep.subr.mxu0 0.0
        %328 = vmatpush2.msra.mxu0 0.0
        %329 = vmatprep.subr.mxu0 0.0
        %330 = vmatpush2.msra.mxu0 0.0
        %331 = vmatprep.mubr.f32.mxu0 0.0
        %332 = vmatmul.mubr.f32.gmra.mxu0 %v262
        %v333 = vpop.f32.mrf.mxu0
        %v334 = vadd.f32 %v253, %v333
        %v335 = vpop.f32.mrf.mxu0
        %336 = vdwg.mxu0
        %v337 = vmax.f32 %v334, 0.0
        %v338 = vld [vmem:[%s3] sm:$0x3]
        %v339 = vld [vmem:[%s4] sm:$0x1]
        %vm340 = vcmask 15360
        %v342 = vsel %vm340, %v337, 0
        %vm344 = vcmask 1041408
        %v346 = vsel %vm344, %v338, 0
        %348 = vmatprep.subr.mxu0 0.0
        %349 = vmatpush1.msra.mxu0 0.0
        %350 = vmatprep.subr.mxu0 0.0
        %351 = vmatpush1.msra.mxu0 0.0
        %352 = vmatprep.subr.mxu0 0.0
        %353 = vmatpush1.msra.mxu0 0.0
        %354 = vmatprep.subr.mxu0 0.0
        %355 = vmatpush1.msra.mxu0 0.0
        %356 = vmatprep.subr.mxu0 0.0
        %357 = vmatpush1.msra.mxu0 0.0
        %358 = vmatprep.subr.mxu0 0.0
        %359 = vmatpush1.msra.mxu0 0.0
        %360 = vmatprep.subr.mxu0 0.0
        %361 = vmatpush1.msra.mxu0 0.0
        %362 = vmatprep.subr.mxu0 0.0
        %363 = vmatpush1.msra.mxu0 0.0
        %364 = vmatprep.subr.mxu0 0.0
        %365 = vmatpush1.msra.mxu0 0.0
        %366 = vmatprep.subr.mxu0 0.0
        %367 = vmatpush1.msra.mxu0 0.0
        %368 = vmatprep.subr.mxu0 0.0
        %369 = vmatpush1.msra.mxu0 0.0
        %370 = vmatprep.subr.mxu0 0.0
        %371 = vmatpush1.msra.mxu0 0.0
        %372 = vmatprep.subr.mxu0 0.0
        %373 = vmatpush1.msra.mxu0 0.0
        %374 = vmatprep.subr.mxu0 0.0
        %375 = vmatpush1.msra.mxu0 0.0
        %376 = vmatprep.subr.mxu0 0.0
        %377 = vmatpush1.msra.mxu0 0.0
        %378 = vmatprep.subr.mxu0 0.0
        %379 = vmatpush1.msra.mxu0 %v346
        %380 = vmatprep.subr.mxu0 0.0
        %381 = vmatpush2.msra.mxu0 0.0
        %382 = vmatprep.subr.mxu0 0.0
        %383 = vmatpush2.msra.mxu0 0.0
        %384 = vmatprep.subr.mxu0 0.0
        %385 = vmatpush2.msra.mxu0 0.0
        %386 = vmatprep.subr.mxu0 0.0
        %387 = vmatpush2.msra.mxu0 0.0
        %388 = vmatprep.subr.mxu0 0.0
        %389 = vmatpush2.msra.mxu0 0.0
        %390 = vmatprep.subr.mxu0 0.0
        %391 = vmatpush2.msra.mxu0 0.0
        %392 = vmatprep.subr.mxu0 0.0
        %393 = vmatpush2.msra.mxu0 0.0
        %394 = vmatprep.subr.mxu0 0.0
        %395 = vmatpush2.msra.mxu0 0.0
        %396 = vmatprep.subr.mxu0 0.0
        %397 = vmatpush2.msra.mxu0 0.0
        %398 = vmatprep.subr.mxu0 0.0
        %399 = vmatpush2.msra.mxu0 0.0
        %400 = vmatprep.subr.mxu0 0.0
        %401 = vmatpush2.msra.mxu0 0.0
        %402 = vmatprep.subr.mxu0 0.0
        %403 = vmatpush2.msra.mxu0 0.0
        %404 = vmatprep.subr.mxu0 0.0
        %405 = vmatpush2.msra.mxu0 0.0
        %406 = vmatprep.subr.mxu0 0.0
        %407 = vmatpush2.msra.mxu0 0.0
        %408 = vmatprep.subr.mxu0 0.0
        %409 = vmatpush2.msra.mxu0 0.0
        %410 = vmatprep.subr.mxu0 0.0
        %411 = vmatpush2.msra.mxu0 0.0
        %412 = vmatprep.mubr.f32.mxu0 0.0
        %413 = vmatmul.mubr.f32.gmra.mxu0 %v342
        %v414 = vpop.f32.mrf.mxu0
        %v415 = vadd.f32 %v339, %v414
        %v416 = vpop.f32.mrf.mxu0
        %417 = vdwg.mxu0
        %v418 = vxor.u32 %v415, 2147483648
        %v419 = vmul.f32 %v418, 1.442695
        %v420 = vpow.pop %v419
        %v421 = vadd.f32 %v420, 1.0
        %v422 = vrcp.pop %v421
        %v423 = vmul.f32 1.0, %v422
        %v424 = vlaneseq
        %v425 = vshrl.u32 %v424, 7
        %v426 = vsub.s32 0, %v425
        %v427 = vrot.slane %v423, %v426
        %429 = vbcast.lane.b32.xlu0 %v427, 256
        %v430 = vpop.permute.xlu0 %429
        %v433 = vunpack.c.l.s4 839922192
        %v434 = vunpack.c.0.s8 %v433
        %v435 = vlaneseq
        %v436 = vshrl.u32 %v435, 7
        %v437 = vsub.s32 %v434, %v436
        %v438 = vrot.slane %v430, %v437
        %v440 = vmul.f32 %v241, %v438
        %441 = vst [vmem:[%s240] sm:$0xff] %v440
        %s442 = sand.u32 %s140, 1
        %s443 = scalar_lea.sflag [#allocation4], %s442
        %s444 = sand.u32 %s140, 1
        %s445 = smul.addr %s444, 8
        %s446 = scalar_lea.vmem [#allocation5], %s445
        // Predicated region
        $region45: #{tpu_custom_call.1} parent=39 // pred_check
          %p447 = pneg %p150
        $region46: #{tpu_custom_call.1} parent=39 // pred_check_branch
          %449 = sbr.rel (%p447) target = $region48
        $region47: #{tpu_custom_call.1} parent=39 // pred_region
          %s451 = ssub.s32 128, 128
          %452 = vsyncadd %s443, %s451
          %s453 = smul.addr %s22, 2
          %s454 = smul.addr %s453, 64
          %s455 = scalar_lea.hbm %s5, %s454
          %s457 = sshll.u32 %s446, 4
          %s458 = int_to_ptr.vmem [resolvable:$true] %s457
          %460 = dma.vmem_to_hbm [thread:$0]  %s458, 128, %s455, %s443
        $region48: #{tpu_custom_call.1} parent=39 // pred_fallthru
          _
      $region40: #{tpu_custom_call.1} parent=5 // pred_fallthru
        _
      %p461 = scmp.le.s32.totalorder 2, %s17
      // Predicated region
      $region49: #{tpu_custom_call.1} parent=5 // pred_check
        %p462 = pneg %p461
      $region50: #{tpu_custom_call.1} parent=5 // pred_check_branch
        %464 = sbr.rel (%p462) target = $region52
      $region51: #{tpu_custom_call.1} parent=5 // pred_region
        %s465 = ssub.s32 %s17, 2
        // Predicated region
        $region53: #{tpu_custom_call.1} parent=51 // pred_check
          %p466 = pneg %p156
        $region54: #{tpu_custom_call.1} parent=51 // pred_check_branch
          %468 = sbr.rel (%p466) target = $region56
        $region55: #{tpu_custom_call.1} parent=51 // pred_region
          %s469 = sand.u32 %s141, 1
          %s470 = scalar_lea.sflag [#allocation4], %s469
          %s471 = sand.u32 %s141, 1
          %s472 = smul.addr %s471, 8
          %s473 = scalar_lea.vmem [#allocation5], %s472
          %474 = dma.done %s470, 128
        $region56: #{tpu_custom_call.1} parent=51 // pred_fallthru
          _
      $region52: #{tpu_custom_call.1} parent=5 // pred_fallthru
        _
    $region6: #{tpu_custom_call.1} parent=1 // loop_footer
      %s21 = sadd.s32 1, %s17
    $region7: #{tpu_custom_call.1} parent=1 // loop_footer_branch
      %16 = sbr.rel target = $region3
    $region8: #{tpu_custom_call.1} parent=1 // loop_exit
      _
    %475 = vsyncpa [#allocation3], 1
    %s476 = scalar_lea.sflag [#allocation3], 1
    %477 = vsyncpa %s476, 1
    %478 = vsyncpa [#allocation4], 1
    %s479 = scalar_lea.sflag [#allocation4], 1
    %480 = vsyncpa %s479, 1

</llo_original>
